<compile_context>
chip_gen: v6e
topology: v6e:2x2x1
jax: 0.10.0
libtpu: 0.0.40
codegen_flags: <defaults>
</compile_context>

<pallas_src>
import jax
import jax.numpy as jnp
from jax.experimental import pallas as pl
from jax.experimental.pallas import tpu as pltpu


# ----------------------------------------------------------------------------
# Glue: quaternion (w, x, y, z) -> rotation matrix (pytorch3d convention).
# ----------------------------------------------------------------------------
def quat_to_rotmat(q):
    w, x, y, z = q[0], q[1], q[2], q[3]
    return jnp.array(
        [
            [1.0 - 2.0 * (y * y + z * z), 2.0 * (x * y - w * z), 2.0 * (x * z + w * y)],
            [2.0 * (x * y + w * z), 1.0 - 2.0 * (x * x + z * z), 2.0 * (y * z - w * x)],
            [2.0 * (x * z - w * y), 2.0 * (y * z + w * x), 1.0 - 2.0 * (x * x + y * y)],
        ],
        dtype=jnp.float32,
    )


# ----------------------------------------------------------------------------
# Kernel: per-tile transform + fused visibility mask -> (8, 128) partial sums.
# ----------------------------------------------------------------------------
def pose_mask_kernel(prm_ref, pts_ref, out_ref):
    # --- scalar parameters (SMEM) ---
    m00, m01, m02 = prm_ref[0], prm_ref[1], prm_ref[2]
    m10, m11, m12 = prm_ref[3], prm_ref[4], prm_ref[5]
    m20, m21, m22 = prm_ref[6], prm_ref[7], prm_ref[8]
    k00, k01, k02 = prm_ref[9], prm_ref[10], prm_ref[11]
    k10, k11, k12 = prm_ref[12], prm_ref[13], prm_ref[14]
    k20, k21, k22 = prm_ref[15], prm_ref[16], prm_ref[17]
    b0, b1, b2 = prm_ref[18], prm_ref[19], prm_ref[20]
    mean = prm_ref[21]
    inv_std2 = prm_ref[22]
    half_w, inv_w = prm_ref[23], prm_ref[24]
    half_h, inv_h = prm_ref[25], prm_ref[26]
    eps = prm_ref[27]

    # --- per-point coordinates, dense (tile_rows, 128) blocks ---
    px = pts_ref[0]
    py = pts_ref[1]
    pz = pts_ref[2]

    # camera-frame points: cam = M @ p + b   (M = R(q)^T, b = -M @ t)
    cam_x = m00 * px + m01 * py + m02 * pz + b0
    cam_y = m10 * px + m11 * py + m12 * pz + b1
    cam_z = m20 * px + m21 * py + m22 * pz + b2

    # homogeneous image coords: h = K @ cam  (general 3x3, not pinhole-specialized)
    hx = k00 * cam_x + k01 * cam_y + k02 * cam_z
    hy = k10 * cam_x + k11 * cam_y + k12 * cam_z
    hz = k20 * cam_x + k21 * cam_y + k22 * cam_z

    # distance term: ||cam - mean||^2 / std^2
    dx = cam_x - mean
    dy = cam_y - mean
    dz = cam_z - mean
    d2 = dx * dx + dy * dy + dz * dz

    # one shared reciprocal for both projection axes (full precision for the
    # rtol=1e-4 check; flip approx=True if a looser tolerance is acceptable)
    inv_z = pl.reciprocal(hz + eps, approx=False)
    wa = (hx * inv_z - half_w) * inv_w
    hb = (hy * inv_z - half_h) * inv_h

    # fused gaussian: dist_mask * width_g * height_g collapsed into one exp.
    # Sentinel-padded lanes have huge d2 -> exp underflows to exactly 0.
    mask = jax.nn.sigmoid(hz) * jnp.exp(-0.5 * (d2 * inv_std2 + wa * wa + hb * hb))

    # fold sublane groups into one (8, 128) block — pure VPU adds, no XLU.
    tile_rows = mask.shape[0]
    partial = mask[0:8, :]
    for r in range(8, tile_rows, 8):
        partial = partial + mask[r:r + 8, :]
    out_ref[...] = partial


# ----------------------------------------------------------------------------
# Wrapper
# ----------------------------------------------------------------------------
def model_pose_loss(points, trans0, q0, intrins, img_width, img_height,
                    min_dist=1.0, max_dist=5.0, eps=1e-6, tile_points=8192):
    points = points.astype(jnp.float32)
    n = points.shape[0]
    lanes = 128

    n_rows = -(-n // lanes)                                   # ceil(n / 128)
    default_rows = max(8, (tile_points // lanes) // 8 * 8)    # 64 rows = 8192 pts
    tile_rows = min(default_rows, -(-n_rows // 8) * 8)        # small clouds: 1 block
    n_rows_pad = -(-n_rows // tile_rows) * tile_rows
    n_pad = n_rows_pad * lanes
    num_tiles = n_rows_pad // tile_rows

    mean = (min_dist + max_dist) / 2.0
    std = (max_dist - min_dist) / 2.0

    # Sentinel padding: guaranteed >= 32*std away from `mean` in camera frame,
    # so 0.5*d2/std^2 > 1500 and the fused exp underflows to exactly 0.
    sentinel = jnp.float32(abs(mean) + 32.0 * abs(std)) + jnp.max(jnp.abs(trans0))
    pts_cm = jnp.full((3, n_pad), sentinel, jnp.float32)
    pts_cm = pts_cm.at[:, :n].set(points.T)
    pts_cm = pts_cm.reshape(3, n_rows_pad, lanes)

    # quaternion normalize + invert, build M = R(q)^T and b = -M @ t
    q = q0.reshape(4).astype(jnp.float32)
    q = q / jnp.linalg.norm(q)
    q_inv = q * jnp.array([1.0, -1.0, -1.0, -1.0], jnp.float32)
    mat = quat_to_rotmat(q_inv)
    bvec = -(mat @ trans0.reshape(3).astype(jnp.float32))

    params = jnp.concatenate([
        mat.reshape(9),
        intrins.astype(jnp.float32).reshape(9),
        bvec.reshape(3),
        jnp.array([mean, 1.0 / (std * std),
                   float(img_width) * 0.5, 1.0 / float(img_width),
                   float(img_height) * 0.5, 1.0 / float(img_height),
                   float(eps)], jnp.float32),
    ])
    params = jnp.pad(params, (0, 32 - params.shape[0]))

    partials = pl.pallas_call(
        pose_mask_kernel,
        out_shape=jax.ShapeDtypeStruct((8, num_tiles * lanes), jnp.float32),
        grid_spec=pltpu.PrefetchScalarGridSpec(
            num_scalar_prefetch=0,
            grid=(num_tiles,),
            in_specs=[
                pl.BlockSpec(memory_space=pltpu.MemorySpace.SMEM),          # params
                pl.BlockSpec((3, tile_rows, lanes), lambda i: (0, i, 0)),   # points
            ],
            out_specs=pl.BlockSpec((8, lanes), lambda i: (0, i)),
        ),
        compiler_params=pltpu.CompilerParams(
            dimension_semantics=("parallel",)),
    )(params, pts_cm)

    # tiny final reduction + criterion (1 / (sum + eps)) in plain JAX
    return 1.0 / (jnp.sum(partials) + eps)


# ----------------------------------------------------------------------------
# Pure-JAX reference (mirrors the PyTorch forward exactly)
# ----------------------------------------------------------------------------
def ref_loss(points, trans0, q0, intrins, img_width, img_height,
             min_dist=1.0, max_dist=5.0, eps=1e-6):
    q = q0.reshape(4) / jnp.linalg.norm(q0)
    q_inv = q * jnp.array([1.0, -1.0, -1.0, -1.0], jnp.float32)
    mat = quat_to_rotmat(q_inv)
    cam = (points - trans0.reshape(1, 3)) @ mat.T
    mean = (min_dist + max_dist) / 2.0
    std = (max_dist - min_dist) / 2.0
    dist = jnp.linalg.norm(cam - mean, axis=1)
    dist_mask = jnp.exp(-0.5 * (dist / std) ** 2)
    homo = intrins @ cam.T
    depth_sig = jax.nn.sigmoid(homo[2])
    wg = jnp.exp(-0.5 * ((homo[0] / (homo[2] + eps) - img_width / 2.0) / img_width) ** 2)
    hg = jnp.exp(-0.5 * ((homo[1] / (homo[2] + eps) - img_height / 2.0) / img_height) ** 2)
    mask = dist_mask * depth_sig * wg * hg
    return 1.0 / (jnp.sum(mask) + eps)


if __name__ == "__main__":
    key = jax.random.PRNGKey(0)
    k1, k2, k3 = jax.random.split(key, 3)

    n_points = 300                      # not a multiple of 128 -> exercises sentinel padding
    img_width, img_height = 128.0, 96.0

    points = jax.random.uniform(k1, (n_points, 3), jnp.float32, minval=0.0, maxval=6.0)
    trans0 = jax.random.normal(k2, (1, 3), jnp.float32) * 0.1
    q0 = jax.random.normal(k3, (1, 4), jnp.float32) + jnp.array([[2.0, 0.0, 0.0, 0.0]])
    intrins = jnp.array(
        [[100.0, 0.0, 64.0],
         [0.0, 100.0, 48.0],
         [0.0, 0.0, 1.0]], jnp.float32)

    # TODO(synk): hpr=True branch (hidden_pts_removal) has no definition in the
    # reference module and is skipped (default forward uses hpr=False).

    loss = model_pose_loss(points, trans0, q0, intrins, img_width, img_height)
    loss = jax.block_until_ready(loss)
    expected = ref_loss(points, trans0, q0, intrins, img_width, img_height)
    assert jnp.isfinite(loss), "kernel produced non-finite loss"
    assert jnp.allclose(loss, expected, rtol=1e-4, atol=1e-6), (loss, expected)

    # multi-tile configuration (grid > 1) to exercise the pipelined path
    n_big = 20000
    pts_big = jax.random.uniform(jax.random.PRNGKey(1), (n_big, 3), jnp.float32,
                                 minval=0.0, maxval=6.0)
    loss_big = model_pose_loss(pts_big, trans0, q0, intrins, img_width, img_height)
    loss_big = jax.block_until_ready(loss_big)
    exp_big = ref_loss(pts_big, trans0, q0, intrins, img_width, img_height)
    assert jnp.isfinite(loss_big), "kernel produced non-finite loss (big)"
    assert jnp.allclose(loss_big, exp_big, rtol=1e-4, atol=1e-6), (loss_big, exp_big)

    print("KERNEL_OK")
</pallas_src>

<mosaic_0001>
module attributes {stable_mosaic.version = 11 : i64} {
  func.func @pose_mask_kernel(%arg0: i32, %arg1: memref<32xf32, #tpu.memory_space<smem>>, %arg2: memref<3x8x128xf32, #tpu.memory_space<vmem>>, %arg3: memref<8x128xf32, #tpu.memory_space<vmem>>) attributes {dimension_semantics = [#tpu.dimension_semantics<parallel>], iteration_bounds = array<i64: 1>, scalar_prefetch = 0 : i64, scratch_operands = 0 : i64, tpu.core_type = #tpu.core_type<tc>, window_params = [{transform_indices = @transform_0, window_bounds = array<i64: 32>}, {transform_indices = @transform_1, window_bounds = array<i64: 3, 8, 128>}, {transform_indices = @transform_2, window_bounds = array<i64: 8, 128>}]} {
    %c0 = arith.constant 0 : index
    %0 = memref.load %arg1[%c0] : memref<32xf32, #tpu.memory_space<smem>>
    %c1 = arith.constant 1 : index
    %1 = memref.load %arg1[%c1] : memref<32xf32, #tpu.memory_space<smem>>
    %c2 = arith.constant 2 : index
    %2 = memref.load %arg1[%c2] : memref<32xf32, #tpu.memory_space<smem>>
    %c3 = arith.constant 3 : index
    %3 = memref.load %arg1[%c3] : memref<32xf32, #tpu.memory_space<smem>>
    %c4 = arith.constant 4 : index
    %4 = memref.load %arg1[%c4] : memref<32xf32, #tpu.memory_space<smem>>
    %c5 = arith.constant 5 : index
    %5 = memref.load %arg1[%c5] : memref<32xf32, #tpu.memory_space<smem>>
    %c6 = arith.constant 6 : index
    %6 = memref.load %arg1[%c6] : memref<32xf32, #tpu.memory_space<smem>>
    %c7 = arith.constant 7 : index
    %7 = memref.load %arg1[%c7] : memref<32xf32, #tpu.memory_space<smem>>
    %c8 = arith.constant 8 : index
    %8 = memref.load %arg1[%c8] : memref<32xf32, #tpu.memory_space<smem>>
    %c9 = arith.constant 9 : index
    %9 = memref.load %arg1[%c9] : memref<32xf32, #tpu.memory_space<smem>>
    %c10 = arith.constant 10 : index
    %10 = memref.load %arg1[%c10] : memref<32xf32, #tpu.memory_space<smem>>
    %c11 = arith.constant 11 : index
    %11 = memref.load %arg1[%c11] : memref<32xf32, #tpu.memory_space<smem>>
    %c12 = arith.constant 12 : index
    %12 = memref.load %arg1[%c12] : memref<32xf32, #tpu.memory_space<smem>>
    %c13 = arith.constant 13 : index
    %13 = memref.load %arg1[%c13] : memref<32xf32, #tpu.memory_space<smem>>
    %c14 = arith.constant 14 : index
    %14 = memref.load %arg1[%c14] : memref<32xf32, #tpu.memory_space<smem>>
    %c15 = arith.constant 15 : index
    %15 = memref.load %arg1[%c15] : memref<32xf32, #tpu.memory_space<smem>>
    %c16 = arith.constant 16 : index
    %16 = memref.load %arg1[%c16] : memref<32xf32, #tpu.memory_space<smem>>
    %c17 = arith.constant 17 : index
    %17 = memref.load %arg1[%c17] : memref<32xf32, #tpu.memory_space<smem>>
    %c18 = arith.constant 18 : index
    %18 = memref.load %arg1[%c18] : memref<32xf32, #tpu.memory_space<smem>>
    %c19 = arith.constant 19 : index
    %19 = memref.load %arg1[%c19] : memref<32xf32, #tpu.memory_space<smem>>
    %c20 = arith.constant 20 : index
    %20 = memref.load %arg1[%c20] : memref<32xf32, #tpu.memory_space<smem>>
    %c21 = arith.constant 21 : index
    %21 = memref.load %arg1[%c21] : memref<32xf32, #tpu.memory_space<smem>>
    %c22 = arith.constant 22 : index
    %22 = memref.load %arg1[%c22] : memref<32xf32, #tpu.memory_space<smem>>
    %c23 = arith.constant 23 : index
    %23 = memref.load %arg1[%c23] : memref<32xf32, #tpu.memory_space<smem>>
    %c24 = arith.constant 24 : index
    %24 = memref.load %arg1[%c24] : memref<32xf32, #tpu.memory_space<smem>>
    %c25 = arith.constant 25 : index
    %25 = memref.load %arg1[%c25] : memref<32xf32, #tpu.memory_space<smem>>
    %c26 = arith.constant 26 : index
    %26 = memref.load %arg1[%c26] : memref<32xf32, #tpu.memory_space<smem>>
    %c27 = arith.constant 27 : index
    %27 = memref.load %arg1[%c27] : memref<32xf32, #tpu.memory_space<smem>>
    %c0_0 = arith.constant 0 : index
    %c0_1 = arith.constant 0 : index
    %c0_2 = arith.constant 0 : index
    %28 = vector.load %arg2[%c0_0, %c0_1, %c0_2] : memref<3x8x128xf32, #tpu.memory_space<vmem>>, vector<1x8x128xf32>
    %29 = vector.shape_cast %28 : vector<1x8x128xf32> to vector<8x128xf32>
    %c1_3 = arith.constant 1 : index
    %c0_4 = arith.constant 0 : index
    %c0_5 = arith.constant 0 : index
    %30 = vector.load %arg2[%c1_3, %c0_4, %c0_5] : memref<3x8x128xf32, #tpu.memory_space<vmem>>, vector<1x8x128xf32>
    %31 = vector.shape_cast %30 : vector<1x8x128xf32> to vector<8x128xf32>
    %c2_6 = arith.constant 2 : index
    %c0_7 = arith.constant 0 : index
    %c0_8 = arith.constant 0 : index
    %32 = vector.load %arg2[%c2_6, %c0_7, %c0_8] : memref<3x8x128xf32, #tpu.memory_space<vmem>>, vector<1x8x128xf32>
    %33 = vector.shape_cast %32 : vector<1x8x128xf32> to vector<8x128xf32>
    %34 = vector.broadcast %0 : f32 to vector<8x128xf32>
    %35 = arith.mulf %34, %29 : vector<8x128xf32>
    %36 = vector.broadcast %1 : f32 to vector<8x128xf32>
    %37 = arith.mulf %36, %31 : vector<8x128xf32>
    %38 = arith.addf %35, %37 : vector<8x128xf32>
    %39 = vector.broadcast %2 : f32 to vector<8x128xf32>
    %40 = arith.mulf %39, %33 : vector<8x128xf32>
    %41 = arith.addf %38, %40 : vector<8x128xf32>
    %42 = vector.broadcast %18 : f32 to vector<8x128xf32>
    %43 = arith.addf %41, %42 : vector<8x128xf32>
    %44 = vector.broadcast %3 : f32 to vector<8x128xf32>
    %45 = arith.mulf %44, %29 : vector<8x128xf32>
    %46 = vector.broadcast %4 : f32 to vector<8x128xf32>
    %47 = arith.mulf %46, %31 : vector<8x128xf32>
    %48 = arith.addf %45, %47 : vector<8x128xf32>
    %49 = vector.broadcast %5 : f32 to vector<8x128xf32>
    %50 = arith.mulf %49, %33 : vector<8x128xf32>
    %51 = arith.addf %48, %50 : vector<8x128xf32>
    %52 = vector.broadcast %19 : f32 to vector<8x128xf32>
    %53 = arith.addf %51, %52 : vector<8x128xf32>
    %54 = vector.broadcast %6 : f32 to vector<8x128xf32>
    %55 = arith.mulf %54, %29 : vector<8x128xf32>
    %56 = vector.broadcast %7 : f32 to vector<8x128xf32>
    %57 = arith.mulf %56, %31 : vector<8x128xf32>
    %58 = arith.addf %55, %57 : vector<8x128xf32>
    %59 = vector.broadcast %8 : f32 to vector<8x128xf32>
    %60 = arith.mulf %59, %33 : vector<8x128xf32>
    %61 = arith.addf %58, %60 : vector<8x128xf32>
    %62 = vector.broadcast %20 : f32 to vector<8x128xf32>
    %63 = arith.addf %61, %62 : vector<8x128xf32>
    %64 = vector.broadcast %9 : f32 to vector<8x128xf32>
    %65 = arith.mulf %64, %43 : vector<8x128xf32>
    %66 = vector.broadcast %10 : f32 to vector<8x128xf32>
    %67 = arith.mulf %66, %53 : vector<8x128xf32>
    %68 = arith.addf %65, %67 : vector<8x128xf32>
    %69 = vector.broadcast %11 : f32 to vector<8x128xf32>
    %70 = arith.mulf %69, %63 : vector<8x128xf32>
    %71 = arith.addf %68, %70 : vector<8x128xf32>
    %72 = vector.broadcast %12 : f32 to vector<8x128xf32>
    %73 = arith.mulf %72, %43 : vector<8x128xf32>
    %74 = vector.broadcast %13 : f32 to vector<8x128xf32>
    %75 = arith.mulf %74, %53 : vector<8x128xf32>
    %76 = arith.addf %73, %75 : vector<8x128xf32>
    %77 = vector.broadcast %14 : f32 to vector<8x128xf32>
    %78 = arith.mulf %77, %63 : vector<8x128xf32>
    %79 = arith.addf %76, %78 : vector<8x128xf32>
    %80 = vector.broadcast %15 : f32 to vector<8x128xf32>
    %81 = arith.mulf %80, %43 : vector<8x128xf32>
    %82 = vector.broadcast %16 : f32 to vector<8x128xf32>
    %83 = arith.mulf %82, %53 : vector<8x128xf32>
    %84 = arith.addf %81, %83 : vector<8x128xf32>
    %85 = vector.broadcast %17 : f32 to vector<8x128xf32>
    %86 = arith.mulf %85, %63 : vector<8x128xf32>
    %87 = arith.addf %84, %86 : vector<8x128xf32>
    %88 = vector.broadcast %21 : f32 to vector<8x128xf32>
    %89 = arith.subf %43, %88 : vector<8x128xf32>
    %90 = vector.broadcast %21 : f32 to vector<8x128xf32>
    %91 = arith.subf %53, %90 : vector<8x128xf32>
    %92 = vector.broadcast %21 : f32 to vector<8x128xf32>
    %93 = arith.subf %63, %92 : vector<8x128xf32>
    %94 = arith.mulf %89, %89 : vector<8x128xf32>
    %95 = arith.mulf %91, %91 : vector<8x128xf32>
    %96 = arith.addf %94, %95 : vector<8x128xf32>
    %97 = arith.mulf %93, %93 : vector<8x128xf32>
    %98 = arith.addf %96, %97 : vector<8x128xf32>
    %99 = vector.broadcast %27 : f32 to vector<8x128xf32>
    %100 = arith.addf %87, %99 : vector<8x128xf32>
    %101 = tpu.reciprocal %100 : vector<8x128xf32> -> vector<8x128xf32>
    %102 = arith.mulf %71, %101 : vector<8x128xf32>
    %103 = vector.broadcast %23 : f32 to vector<8x128xf32>
    %104 = arith.subf %102, %103 : vector<8x128xf32>
    %105 = vector.broadcast %24 : f32 to vector<8x128xf32>
    %106 = arith.mulf %104, %105 : vector<8x128xf32>
    %107 = arith.mulf %79, %101 : vector<8x128xf32>
    %108 = vector.broadcast %25 : f32 to vector<8x128xf32>
    %109 = arith.subf %107, %108 : vector<8x128xf32>
    %110 = vector.broadcast %26 : f32 to vector<8x128xf32>
    %111 = arith.mulf %109, %110 : vector<8x128xf32>
    %112 = arith.negf %87 : vector<8x128xf32>
    %113 = math.exp %112 : vector<8x128xf32>
    %cst = arith.constant 1.000000e+00 : f32
    %114 = vector.broadcast %cst : f32 to vector<8x128xf32>
    %115 = arith.addf %114, %113 : vector<8x128xf32>
    %116 = arith.divf %114, %115 : vector<8x128xf32>
    %117 = vector.broadcast %22 : f32 to vector<8x128xf32>
    %118 = arith.mulf %98, %117 : vector<8x128xf32>
    %119 = arith.mulf %106, %106 : vector<8x128xf32>
    %120 = arith.addf %118, %119 : vector<8x128xf32>
    %121 = arith.mulf %111, %111 : vector<8x128xf32>
    %122 = arith.addf %120, %121 : vector<8x128xf32>
    %cst_9 = arith.constant -5.000000e-01 : f32
    %123 = vector.broadcast %cst_9 : f32 to vector<8x128xf32>
    %124 = arith.mulf %123, %122 : vector<8x128xf32>
    %125 = math.exp %124 : vector<8x128xf32>
    %126 = arith.mulf %116, %125 : vector<8x128xf32>
    %c0_10 = arith.constant 0 : index
    %c0_11 = arith.constant 0 : index
    %127 = vector.load %arg3[%c0_10, %c0_11] : memref<8x128xf32, #tpu.memory_space<vmem>>, vector<8x128xf32>
    tpu.vector_store %arg3[%c0_10, %c0_11], %126 {strides = array<i32>} : memref<8x128xf32, #tpu.memory_space<vmem>>, vector<8x128xf32>,
    return
  }
  func.func @transform_0(%arg0: i32) -> i32 {
    %c0_i32 = arith.constant 0 : i32
    %c0_i32_0 = arith.constant 0 : i32
    return %c0_i32 : i32
  }
  func.func @transform_1(%arg0: i32) -> (i32, i32, i32) {
    %c0_i32 = arith.constant 0 : i32
    %c0_i32_0 = arith.constant 0 : i32
    %c0_i32_1 = arith.constant 0 : i32
    return %c0_i32, %arg0, %c0_i32_0 : i32, i32, i32
  }
  func.func @transform_2(%arg0: i32) -> (i32, i32) {
    %c0_i32 = arith.constant 0 : i32
    %c0_i32_0 = arith.constant 0 : i32
    return %c0_i32, %arg0 : i32, i32
  }
}

</mosaic_0001>

<llo_original>
// kernel: tpu_custom_call.1
$region0: #{tpu_custom_call.1}
  #allocation0 [shape = 'u32[]', space=smem, size = 0x4, offset = 0x4, fixed_abs, tag = 'smem constant byte address 0x4 - core index']
  #allocation1 [shape = 'u32[144,128]{1,0:T(1,128)}', space=vmem, size = 0x12000, scoped, tag = 'internal scratch']
  %s0 = inlined_call_operand.hbm [shape: f32[32], index: 0, kind: input, shape index: {}]
  %s1 = inlined_call_operand.hbm [shape: f32[3,8,128], index: 1, kind: input, shape index: {}]
  %s2 = inlined_call_operand.hbm [shape: f32[8,128], index: 2, kind: output, shape index: {}]
  %s3 = sld [smem:[#allocation0]]
  $region26: #{tpu_custom_call.1} parent=0
    _
  %s5 = ssub.s32 1, %s3
  %s6 = scalar_select 0, %s5, %s3
  $region1: #{tpu_custom_call.1} parent=0
    #allocation2 [shape = 'u8[512]{0}', space=smem, size = 0x200, scoped, tag = 'input window, operand 0, single buffered']
    #allocation3 [shape = 's32[1]{0}', space=sflag, size = 0x4, scoped, tag = 'scoped memory for tpu_custom_call.1']
    #allocation4 [shape = 's32[1]{0}', space=sflag, size = 0x4, scoped, tag = 'scoped memory for tpu_custom_call.1']
    #allocation5 [shape = 's32[1]{0}', space=sflag, size = 0x4, scoped, tag = 'scoped memory for tpu_custom_call.1']
    #allocation6 [shape = 'u8[12288]{0}', space=vmem, size = 0x3000, scoped, tag = 'input window, operand 1, single buffered']
    #allocation7 [shape = 'u8[4096]{0}', space=vmem, size = 0x1000, scoped, tag = 'output window, operand 0, single buffered']
    %7 = vsyncpa [#allocation5], 0
    %8 = vsyncpa [#allocation3], 0
    %9 = vsyncpa [#allocation4], 0
    // Predicated region
    $region2: #{tpu_custom_call.1} parent=1 // pred_check
      _
    $region3: #{tpu_custom_call.1} parent=1 // pred_check_branch
      %11 = sbr.rel (0) target = $region5
    $region4: #{tpu_custom_call.1} parent=1 // pred_region
      %s13 = ssub.s32 16, 16
      %14 = vsyncadd [#allocation5], %s13
      %17 = dma.hbm_to_smem %s0, 16, [#allocation2], [#allocation5]
    $region5: #{tpu_custom_call.1} parent=1 // pred_fallthru
      _
    // Predicated region
    $region6: #{tpu_custom_call.1} parent=1 // pred_check
      _
    $region7: #{tpu_custom_call.1} parent=1 // pred_check_branch
      %19 = sbr.rel (0) target = $region9
    $region8: #{tpu_custom_call.1} parent=1 // pred_region
      %s21 = ssub.s32 384, 384
      %22 = vsyncadd [#allocation3], %s21
      %s23 = sshll.u32 [#allocation6], 4
      %s24 = int_to_ptr.vmem [resolvable:$true] %s23
      %29 = dma.hbm_to_vmem [thread:$0]  %s1, 384, %s24, [#allocation3], 128, 128, 8
    $region9: #{tpu_custom_call.1} parent=1 // pred_fallthru
      _
    // Predicated region
    $region10: #{tpu_custom_call.1} parent=1 // pred_check
      _
    $region11: #{tpu_custom_call.1} parent=1 // pred_check_branch
      %31 = sbr.rel (0) target = $region13
    $region12: #{tpu_custom_call.1} parent=1 // pred_region
      %32 = dma.done [#allocation5], 16
    $region13: #{tpu_custom_call.1} parent=1 // pred_fallthru
      _
    // Predicated region
    $region14: #{tpu_custom_call.1} parent=1 // pred_check
      _
    $region15: #{tpu_custom_call.1} parent=1 // pred_check_branch
      %34 = sbr.rel (0) target = $region17
    $region16: #{tpu_custom_call.1} parent=1 // pred_region
      %35 = dma.done [#allocation3], 384
    $region17: #{tpu_custom_call.1} parent=1 // pred_fallthru
      _
    %36 = sfence
    %s37 = sld [smem:[#allocation2]]
    %s38 = sld [smem:[#allocation2 + $0x1]]
    %s39 = sld [smem:[#allocation2 + $0x2]]
    %s40 = sld [smem:[#allocation2 + $0x3]]
    %s41 = sld [smem:[#allocation2 + $0x4]]
    %s42 = sld [smem:[#allocation2 + $0x5]]
    %s43 = sld [smem:[#allocation2 + $0x6]]
    %s44 = sld [smem:[#allocation2 + $0x7]]
    %s45 = sld [smem:[#allocation2 + $0x8]]
    %s46 = sld [smem:[#allocation2 + $0x9]]
    %s47 = sld [smem:[#allocation2 + $0xa]]
    %s48 = sld [smem:[#allocation2 + $0xb]]
    %s49 = sld [smem:[#allocation2 + $0xc]]
    %s50 = sld [smem:[#allocation2 + $0xd]]
    %s51 = sld [smem:[#allocation2 + $0xe]]
    %s52 = sld [smem:[#allocation2 + $0xf]]
    %s53 = sld [smem:[#allocation2 + $0x10]]
    %s54 = sld [smem:[#allocation2 + $0x11]]
    %s55 = sld [smem:[#allocation2 + $0x12]]
    %s56 = sld [smem:[#allocation2 + $0x13]]
    %s57 = sld [smem:[#allocation2 + $0x14]]
    %s58 = sld [smem:[#allocation2 + $0x15]]
    %s59 = sld [smem:[#allocation2 + $0x16]]
    %s60 = sld [smem:[#allocation2 + $0x17]]
    %s61 = sld [smem:[#allocation2 + $0x18]]
    %s62 = sld [smem:[#allocation2 + $0x19]]
    %s63 = sld [smem:[#allocation2 + $0x1a]]
    %s64 = sld [smem:[#allocation2 + $0x1b]]
    %v65 = vld [vmem:[#allocation6] sm:$0xff]
    %s66 = scalar_lea.vmem [#allocation6], 8
    %v67 = vld [vmem:[%s66] sm:$0xff]
    %s68 = scalar_lea.vmem [#allocation6], 16
    %v69 = vld [vmem:[%s68] sm:$0xff]
    %v70 = vstv %s37
    %v71 = vmul.f32 %v70, %v65
    %v72 = vstv %s38
    %v73 = vmul.f32 %v72, %v67
    %v74 = vadd.f32 %v71, %v73
    %v75 = vstv %s39
    %v76 = vmul.f32 %v75, %v69
    %v77 = vadd.f32 %v74, %v76
    %v78 = vstv %s55
    %v79 = vadd.f32 %v77, %v78
    %v80 = vstv %s40
    %v81 = vmul.f32 %v80, %v65
    %v82 = vstv %s41
    %v83 = vmul.f32 %v82, %v67
    %v84 = vadd.f32 %v81, %v83
    %v85 = vstv %s42
    %v86 = vmul.f32 %v85, %v69
    %v87 = vadd.f32 %v84, %v86
    %v88 = vstv %s56
    %v89 = vadd.f32 %v87, %v88
    %v90 = vstv %s43
    %v91 = vmul.f32 %v90, %v65
    %v92 = vstv %s44
    %v93 = vmul.f32 %v92, %v67
    %v94 = vadd.f32 %v91, %v93
    %v95 = vstv %s45
    %v96 = vmul.f32 %v95, %v69
    %v97 = vadd.f32 %v94, %v96
    %v98 = vstv %s57
    %v99 = vadd.f32 %v97, %v98
    %v100 = vstv %s46
    %v101 = vmul.f32 %v100, %v79
    %v102 = vstv %s47
    %v103 = vmul.f32 %v102, %v89
    %v104 = vadd.f32 %v101, %v103
    %v105 = vstv %s48
    %v106 = vmul.f32 %v105, %v99
    %v107 = vadd.f32 %v104, %v106
    %v108 = vstv %s49
    %v109 = vmul.f32 %v108, %v79
    %v110 = vstv %s50
    %v111 = vmul.f32 %v110, %v89
    %v112 = vadd.f32 %v109, %v111
    %v113 = vstv %s51
    %v114 = vmul.f32 %v113, %v99
    %v115 = vadd.f32 %v112, %v114
    %v116 = vstv %s52
    %v117 = vmul.f32 %v116, %v79
    %v118 = vstv %s53
    %v119 = vmul.f32 %v118, %v89
    %v120 = vadd.f32 %v117, %v119
    %v121 = vstv %s54
    %v122 = vmul.f32 %v121, %v99
    %v123 = vadd.f32 %v120, %v122
    %v124 = vstv %s58
    %v125 = vsub.f32 %v79, %v124
    %v126 = vsub.f32 %v89, %v124
    %v127 = vsub.f32 %v99, %v124
    %v128 = vmul.f32 %v125, %v125
    %v129 = vmul.f32 %v126, %v126
    %v130 = vadd.f32 %v128, %v129
    %v131 = vmul.f32 %v127, %v127
    %v132 = vadd.f32 %v130, %v131
    %v133 = vstv %s64
    %v134 = vadd.f32 %v123, %v133
    %v135 = vrcp.pop %v134
    %v136 = vmul.f32 %v107, %v135
    %v137 = vstv %s60
    %v138 = vsub.f32 %v136, %v137
    %v139 = vstv %s61
    %v140 = vmul.f32 %v138, %v139
    %v141 = vmul.f32 %v115, %v135
    %v142 = vstv %s62
    %v143 = vsub.f32 %v141, %v142
    %v144 = vstv %s63
    %v145 = vmul.f32 %v143, %v144
    %v146 = vxor.u32 %v123, 2147483648
    %v147 = vmul.f32 %v146, 1.442695
    %v148 = vpow.pop %v147
    %v149 = vadd.f32 %v148, 1.0
    %v150 = vrcp.pop %v149
    %v151 = vmul.f32 1.0, %v150
    %v152 = vstv %s59
    %v153 = vmul.f32 %v132, %v152
    %v154 = vmul.f32 %v140, %v140
    %v155 = vadd.f32 %v153, %v154
    %v156 = vmul.f32 %v145, %v145
    %v157 = vadd.f32 %v155, %v156
    %v158 = vmul.f32 %v157, -0.5
    %v159 = vmul.f32 %v158, 1.442695
    %v160 = vpow.pop %v159
    %v161 = vmul.f32 %v151, %v160
    %162 = vst [vmem:[#allocation7] sm:$0xff] %v161
    // Predicated region
    $region18: #{tpu_custom_call.1} parent=1 // pred_check
      _
    $region19: #{tpu_custom_call.1} parent=1 // pred_check_branch
      %164 = sbr.rel (0) target = $region21
    $region20: #{tpu_custom_call.1} parent=1 // pred_region
      %s166 = ssub.s32 128, 128
      %167 = vsyncadd [#allocation4], %s166
      %s169 = sshll.u32 [#allocation7], 4
      %s170 = int_to_ptr.vmem [resolvable:$true] %s169
      %172 = dma.vmem_to_hbm [thread:$0]  %s170, 128, %s2, [#allocation4]
    $region21: #{tpu_custom_call.1} parent=1 // pred_fallthru
      _
    // Predicated region
    $region22: #{tpu_custom_call.1} parent=1 // pred_check
      _
    $region23: #{tpu_custom_call.1} parent=1 // pred_check_branch
      %174 = sbr.rel (0) target = $region25
    $region24: #{tpu_custom_call.1} parent=1 // pred_region
      %175 = dma.done [#allocation4], 128
    $region25: #{tpu_custom_call.1} parent=1 // pred_fallthru
      _
    %176 = vsyncpa [#allocation3], 1
    %177 = vsyncpa [#allocation4], 1
    %178 = vsyncpa [#allocation5], 1

</llo_original>
